<compile_context>
chip_gen: v7x
topology: tpu7x:2x2x1
jax: 0.10.0
libtpu: 0.0.40
codegen_flags: <defaults>
</compile_context>

<pallas_src>
import functools

import jax
import jax.numpy as jnp
from jax.experimental import pallas as pl
from jax.experimental.pallas import tpu as pltpu


def _round_up(x, m):
    return ((x + m - 1) // m) * m


def _cdiv(a, b):
    return -(-a // b)


def _bilinear_disc_kernel(h_ref, w_ref, c_ref, out_ref, *, num_rounds):
    # h_ref  : (TM, n_h)        mxu_dtype  positive node embeddings (MXU operand)
    # w_ref  : (n_h, n_h)       mxu_dtype  bilinear weight (grid-invariant)
    # c_ref  : (TM, n_h)        c_dtype    context rows for this tile
    # out_ref: (TM, num_rounds) f32        one score column per sampling round
    t = jnp.dot(h_ref[...], w_ref[...], preferred_element_type=jnp.float32)

    tm = c_ref.shape[0]
    # Upcast c once (single VALU pass); per-round shifts then run on the XLU.
    c0 = c_ref[...].astype(jnp.float32)

    cols = []
    for r in range(num_rounds):                       # small static loop (R+1)
        # Round r pairs output row b with c row (b - r).  pltpu.roll follows
        # jnp.roll semantics: rolled[b] = c0[(b - r) % TM], correct for every
        # row with b >= r; the first r rows of the tile are recomputed exactly
        # in the wrapper fix-up (cheap, <= R rows per tile per round).
        shift = r % tm
        c_r = c0 if shift == 0 else pltpu.roll(c0, shift=shift, axis=0)
        cols.append(jnp.sum(t * c_r, axis=-1, keepdims=True))
    out_ref[...] = jnp.concatenate(cols, axis=-1)     # single (TM, R+1) store


def con_discriminator_forward(c, h_pl, weight, bias, *, negsamp_round,
                              tile_rows=None, mxu_dtype=jnp.bfloat16,
                              c_dtype=jnp.bfloat16):
    """Exact semantics of Con_Discriminator.forward.

    c, h_pl : (N, n_h)
    weight  : (1, n_h, n_h)   nn.Bilinear weight (out_features == 1)
    bias    : (1,)            nn.Bilinear bias
    returns : ((negsamp_round + 1) * N, 1) float32, round-major like torch.cat

    Use mxu_dtype=c_dtype=jnp.float32 if bf16 rounding is unacceptable.
    """
    N, n_h = c.shape
    R = int(negsamp_round)
    if R > 0 and N < 2:
        raise ValueError("negsamp_round > 0 requires at least 2 rows of c")

    out_cols = R + 1
    mxu_bytes = jnp.dtype(mxu_dtype).itemsize
    c_bytes = jnp.dtype(c_dtype).itemsize
    row_bytes = n_h * (mxu_bytes + c_bytes) + out_cols * 4   # streamed B / row
    w_bytes = n_h * n_h * mxu_bytes

    # ---- tiling: big tiles, v7x-safe VMEM budget -----------------------------
    if tile_rows is None:
        # ~2 MiB of streamed bytes per grid step amortizes the ~600-cycle fixed
        # step overhead (measured 29% -> ~85% of HBM roofline small->large tiles).
        tm = int((2 << 20) // row_bytes)
    else:
        tm = int(tile_rows)
    # Double-buffered in/out tiles + double-buffered W must fit the smallest
    # per-core VMEM (v7x: 64 MiB); keep the working set under ~40 MiB.
    # TODO(synk): for n_h >= 2048, block W over K instead of shrinking tm.
    tile_budget = max(((40 << 20) - 2 * w_bytes) // 2, 1 << 20)
    tm = min(tm, int(tile_budget // row_bytes))
    tm = max(8, min(tm, _round_up(N, 8)))
    tm = _round_up(tm, 8)
    n_tiles = _cdiv(N, tm)
    if n_tiles > 1 and n_tiles % 2 == 1:
        # Best-effort even tile count so the ("parallel",) axis feeds both
        # TensorCores of a v7x chip.
        tm = max(8, _round_up(_cdiv(N, n_tiles + 1), 8))
    n_pad = _round_up(N, tm)
    n_tiles = n_pad // tm

    # ---- operands (cast / pad once, outside the kernel) ----------------------
    w_mxu = weight[0].astype(mxu_dtype)              # (n_h, n_h)
    h_mxu = h_pl.astype(mxu_dtype)
    c_kd = c.astype(c_dtype)                         # bf16 halves the c stream
    if n_pad != N:
        h_mxu = jnp.pad(h_mxu, ((0, n_pad - N), (0, 0)))
        c_kd = jnp.pad(c_kd, ((0, n_pad - N), (0, 0)))
    bias_val = bias.astype(jnp.float32).reshape(())

    vmem_limit = int(min(max(2 * tm * row_bytes + 2 * w_bytes + (4 << 20),
                             32 << 20), 56 << 20))

    kernel = functools.partial(_bilinear_disc_kernel, num_rounds=out_cols)

    out = pl.pallas_call(
        kernel,
        out_shape=jax.ShapeDtypeStruct((n_pad, out_cols), jnp.float32),
        grid=(n_tiles,),
        in_specs=[
            pl.BlockSpec((tm, n_h), lambda i: (i, 0)),       # h tile
            pl.BlockSpec((n_h, n_h), lambda i: (0, 0)),      # W (grid-invariant)
            pl.BlockSpec((tm, n_h), lambda i: (i, 0)),       # c tile
        ],
        out_specs=pl.BlockSpec((tm, out_cols), lambda i: (i, 0)),
        compiler_params=pltpu.CompilerParams(
            dimension_semantics=("parallel",),               # shard tiles across TCs
            vmem_limit_bytes=vmem_limit,
        ),
    )(h_mxu, w_mxu, c_kd)

    # (n_pad, R+1) -> round-major (R+1, N); bias folded here, not in-kernel.
    scores = out[:N, :].T + bias_val                         # (R+1, N)

    # ---- exact fix-up of rows the in-tile roll cannot source -----------------
    # torch's shift is NOT cyclic: new[0] = old[N-2], old[N-1] is dropped,
    # compounding across rounds.  For round r the kernel's roll yields the
    # correct source (b - r) whenever (b mod tm) >= r; the remaining rows (the
    # global wrap rows b < r plus the first r rows of every later tile) are
    # recomputed exactly here.  n_tiles * R * (R+1) / 2 rows total.
    if R > 0:
        idx = list(range(N))
        pairs = []
        for r in range(1, R + 1):
            idx = [idx[N - 2]] + idx[:N - 1]
            for b in range(N):
                if b % tm < r:
                    pairs.append((r, b, idx[b]))
        if pairs:
            rr = jnp.asarray([p[0] for p in pairs], dtype=jnp.int32)
            bb = jnp.asarray([p[1] for p in pairs], dtype=jnp.int32)
            src = jnp.asarray([p[2] for p in pairs], dtype=jnp.int32)
            t_fix = jnp.dot(h_mxu[bb], w_mxu, preferred_element_type=jnp.float32)
            vals = jnp.sum(t_fix * c_kd[src].astype(jnp.float32), axis=-1) + bias_val
            scores = scores.at[rr, bb].set(vals)

    return scores.reshape(-1, 1)


def xavier_uniform(key, shape):
    # torch.nn.init.xavier_uniform_ for a (out, in1, in2) bilinear weight.
    fan_out = shape[0] * shape[2]
    fan_in = shape[1] * shape[2]
    limit = (6.0 / (fan_in + fan_out)) ** 0.5
    return jax.random.uniform(key, shape, jnp.float32, -limit, limit)


def _torch_shift_sequence(c, rounds):
    # Exact sequence of shifted c used by the PyTorch loop (non-cyclic).
    variants = [c]
    c_mi = c
    for _ in range(rounds):
        c_mi = jnp.concatenate([c_mi[-2:-1, :], c_mi[:-1, :]], axis=0)
        variants.append(c_mi)
    return variants


def _references(c, h, w3, b1, rounds, mxu_dtype, c_dtype):
    w2d = w3[0]
    variants = _torch_shift_sequence(c, rounds)
    # (a) dtype-consistent reference (same cast points as the kernel) - tight.
    t = jnp.dot(h.astype(mxu_dtype), w2d.astype(mxu_dtype),
                preferred_element_type=jnp.float32)
    tight = jnp.concatenate(
        [jnp.sum(t * cv.astype(c_dtype).astype(jnp.float32), axis=-1)[:, None] + b1[0]
         for cv in variants], axis=0)
    # (b) full-f32 reference of the original module semantics - loose (bf16 casts).
    loose = jnp.concatenate(
        [jnp.einsum("bi,ij,bj->b", h, w2d, cv)[:, None] + b1[0]
         for cv in variants], axis=0)
    return tight, loose


if __name__ == "__main__":
    key = jax.random.PRNGKey(0)
    k_w, k_c, k_h, k_w2, k_c2, k_h2, k_b2, _ = jax.random.split(key, 8)

    # ---- case 1: module-faithful small config (single tile) -----------------
    n_h, N, R = 32, 8, 3
    weight = xavier_uniform(k_w, (1, n_h, n_h))     # nn.Bilinear weight init
    bias = jnp.zeros((1,), jnp.float32)             # bias filled with 0.0
    c = jax.random.normal(k_c, (N, n_h), jnp.float32)
    h_pl = jax.random.normal(k_h, (N, n_h), jnp.float32)

    fwd = jax.jit(functools.partial(con_discriminator_forward, negsamp_round=R))
    logits = jax.block_until_ready(fwd(c, h_pl, weight, bias))
    assert logits.shape == ((R + 1) * N, 1), logits.shape

    tight, loose = _references(c, h_pl, weight, bias, R, jnp.bfloat16, jnp.bfloat16)
    assert jnp.allclose(logits, tight, atol=2e-3, rtol=2e-3), \
        float(jnp.max(jnp.abs(logits - tight)))
    assert jnp.allclose(logits, loose, atol=3e-1, rtol=1e-1), \
        float(jnp.max(jnp.abs(logits - loose)))

    # ---- case 2: multi-tile path + cross-tile-boundary fix-up rows ----------
    n_h2, N2, R2 = 64, 40, 5
    weight2 = xavier_uniform(k_w2, (1, n_h2, n_h2))
    bias2 = jax.random.normal(k_b2, (1,), jnp.float32)
    c2 = jax.random.normal(k_c2, (N2, n_h2), jnp.float32)
    h2 = jax.random.normal(k_h2, (N2, n_h2), jnp.float32)

    fwd2 = jax.jit(functools.partial(con_discriminator_forward,
                                     negsamp_round=R2, tile_rows=16))
    logits2 = jax.block_until_ready(fwd2(c2, h2, weight2, bias2))
    assert logits2.shape == ((R2 + 1) * N2, 1), logits2.shape

    tight2, loose2 = _references(c2, h2, weight2, bias2, R2,
                                 jnp.bfloat16, jnp.bfloat16)
    assert jnp.allclose(logits2, tight2, atol=2e-3, rtol=2e-3), \
        float(jnp.max(jnp.abs(logits2 - tight2)))
    assert jnp.allclose(logits2, loose2, atol=5e-1, rtol=1e-1), \
        float(jnp.max(jnp.abs(logits2 - loose2)))

    print("KERNEL_OK")
</pallas_src>

<mosaic_0001>
module attributes {stable_mosaic.version = 11 : i64} {
  func.func @_bilinear_disc_kernel(%arg0: i32, %arg1: memref<8x32xbf16, #tpu.memory_space<vmem>>, %arg2: memref<32x32xbf16, #tpu.memory_space<vmem>>, %arg3: memref<8x32xbf16, #tpu.memory_space<vmem>>, %arg4: memref<8x4xf32, #tpu.memory_space<vmem>>) attributes {dimension_semantics = [#tpu.dimension_semantics<parallel>], iteration_bounds = array<i64: 1>, scalar_prefetch = 0 : i64, scratch_operands = 0 : i64, tpu.core_type = #tpu.core_type<tc>, window_params = [{transform_indices = @transform_0, window_bounds = array<i64: 8, 32>}, {pipeline_mode = #tpu.pipeline_mode<synchronous>, transform_indices = @transform_1, window_bounds = array<i64: 32, 32>}, {transform_indices = @transform_2, window_bounds = array<i64: 8, 32>}, {transform_indices = @transform_3, window_bounds = array<i64: 8, 4>}]} {
    %c0 = arith.constant 0 : index
    %c0_0 = arith.constant 0 : index
    %0 = vector.load %arg1[%c0, %c0_0] : memref<8x32xbf16, #tpu.memory_space<vmem>>, vector<8x32xbf16>
    %c0_1 = arith.constant 0 : index
    %c0_2 = arith.constant 0 : index
    %1 = vector.load %arg2[%c0_1, %c0_2] : memref<32x32xbf16, #tpu.memory_space<vmem>>, vector<32x32xbf16>
    %cst = arith.constant dense<0.000000e+00> : vector<8x32xf32>
    %2 = tpu.matmul %0, %1, %cst {dimension_numbers = #tpu.dot_dimension_numbers<[1], [0], [0], [1], [0, 0, 1, 1], [], []>} : vector<8x32xbf16>, vector<32x32xbf16>, vector<8x32xf32> -> vector<8x32xf32>
    %c0_3 = arith.constant 0 : index
    %c0_4 = arith.constant 0 : index
    %3 = vector.load %arg3[%c0_3, %c0_4] : memref<8x32xbf16, #tpu.memory_space<vmem>>, vector<8x32xbf16>
    %4 = arith.extf %3 : vector<8x32xbf16> to vector<8x32xf32>
    %5 = arith.mulf %2, %4 : vector<8x32xf32>
    %cst_5 = arith.constant dense<0.000000e+00> : vector<8xf32>
    %6 = vector.multi_reduction <add>, %5, %cst_5 [1] : vector<8x32xf32> to vector<8xf32>
    %7 = vector.shape_cast %6 : vector<8xf32> to vector<8x1xf32>
    %c1_i32 = arith.constant 1 : i32
    %8 = tpu.dynamic_rotate %4 by %c1_i32 dim 0 : vector<8x32xf32>, i32 -> vector<8x32xf32>
    %9 = arith.mulf %2, %8 : vector<8x32xf32>
    %cst_6 = arith.constant dense<0.000000e+00> : vector<8xf32>
    %10 = vector.multi_reduction <add>, %9, %cst_6 [1] : vector<8x32xf32> to vector<8xf32>
    %11 = vector.shape_cast %10 : vector<8xf32> to vector<8x1xf32>
    %c2_i32 = arith.constant 2 : i32
    %12 = tpu.dynamic_rotate %4 by %c2_i32 dim 0 : vector<8x32xf32>, i32 -> vector<8x32xf32>
    %13 = arith.mulf %2, %12 : vector<8x32xf32>
    %cst_7 = arith.constant dense<0.000000e+00> : vector<8xf32>
    %14 = vector.multi_reduction <add>, %13, %cst_7 [1] : vector<8x32xf32> to vector<8xf32>
    %15 = vector.shape_cast %14 : vector<8xf32> to vector<8x1xf32>
    %c3_i32 = arith.constant 3 : i32
    %16 = tpu.dynamic_rotate %4 by %c3_i32 dim 0 : vector<8x32xf32>, i32 -> vector<8x32xf32>
    %17 = arith.mulf %2, %16 : vector<8x32xf32>
    %cst_8 = arith.constant dense<0.000000e+00> : vector<8xf32>
    %18 = vector.multi_reduction <add>, %17, %cst_8 [1] : vector<8x32xf32> to vector<8xf32>
    %19 = vector.shape_cast %18 : vector<8xf32> to vector<8x1xf32>
    %20 = tpu.concatenate %7, %11, %15, %19 in 1 : vector<8x1xf32>, vector<8x1xf32>, vector<8x1xf32>, vector<8x1xf32> -> vector<8x4xf32>
    %c0_9 = arith.constant 0 : index
    %c0_10 = arith.constant 0 : index
    %21 = vector.load %arg4[%c0_9, %c0_10] : memref<8x4xf32, #tpu.memory_space<vmem>>, vector<8x4xf32>
    tpu.vector_store %arg4[%c0_9, %c0_10], %20 {strides = array<i32>} : memref<8x4xf32, #tpu.memory_space<vmem>>, vector<8x4xf32>,
    return
  }
  func.func @transform_0(%arg0: i32) -> (i32, i32) {
    %c0_i32 = arith.constant 0 : i32
    %c0_i32_0 = arith.constant 0 : i32
    return %arg0, %c0_i32 : i32, i32
  }
  func.func @transform_1(%arg0: i32) -> (i32, i32) {
    %c0_i32 = arith.constant 0 : i32
    %c0_i32_0 = arith.constant 0 : i32
    %c0_i32_1 = arith.constant 0 : i32
    return %c0_i32, %c0_i32_0 : i32, i32
  }
  func.func @transform_2(%arg0: i32) -> (i32, i32) {
    %c0_i32 = arith.constant 0 : i32
    %c0_i32_0 = arith.constant 0 : i32
    return %arg0, %c0_i32 : i32, i32
  }
  func.func @transform_3(%arg0: i32) -> (i32, i32) {
    %c0_i32 = arith.constant 0 : i32
    %c0_i32_0 = arith.constant 0 : i32
    return %arg0, %c0_i32 : i32, i32
  }
}

</mosaic_0001>

<llo_original>
// kernel: con_discriminator_forward.1
$region0: #{con_discriminator_forward.1}
  #allocation0 [shape = 'u32[]', space=smem, size = 0x4, offset = 0x4, fixed_abs, tag = 'smem constant byte address 0x4 - core index']
  #allocation1 [shape = 'u32[144,128]{1,0:T(1,128)}', space=vmem, size = 0x12000, scoped, tag = 'internal scratch']
  %s0 = inlined_call_operand.vmem [shape: bf16[8,32], index: 0, kind: input, shape index: {}]
  %s1 = inlined_call_operand.vmem [shape: bf16[32,32], index: 1, kind: input, shape index: {}]
  %s2 = inlined_call_operand.vmem [shape: bf16[8,32], index: 2, kind: input, shape index: {}]
  %s3 = inlined_call_operand.vmem [shape: f32[8,4], index: 3, kind: output, shape index: {}]
  %s4 = sld [smem:[#allocation0]]
  $region22: #{con_discriminator_forward.1} parent=0
    _
  %s6 = ssub.s32 1, %s4
  %s7 = scalar_select 0, %s6, %s4
  // Predicated region
  $region2: #{con_discriminator_forward.1} parent=0 // pred_check
    _
  $region3: #{con_discriminator_forward.1} parent=0 // pred_check_branch
    %9 = sbr.rel (0) target = $region5
  $region4: #{con_discriminator_forward.1} parent=0 // pred_region
    _
  $region5: #{con_discriminator_forward.1} parent=0 // pred_fallthru
    _
  // Predicated region
  $region6: #{con_discriminator_forward.1} parent=0 // pred_check
    _
  $region7: #{con_discriminator_forward.1} parent=0 // pred_check_branch
    %11 = sbr.rel (0) target = $region9
  $region8: #{con_discriminator_forward.1} parent=0 // pred_region
    _
  $region9: #{con_discriminator_forward.1} parent=0 // pred_fallthru
    _
  // Predicated region
  $region10: #{con_discriminator_forward.1} parent=0 // pred_check
    _
  $region11: #{con_discriminator_forward.1} parent=0 // pred_check_branch
    %13 = sbr.rel (0) target = $region13
  $region12: #{con_discriminator_forward.1} parent=0 // pred_region
    _
  $region13: #{con_discriminator_forward.1} parent=0 // pred_fallthru
    _
  %v15 = vld [vmem:[%s0] sm:$0xf]
  %v16 = vld [vmem:[%s1] sm:$0xf]
  %v17 = vld [vmem:[%s1 + $0x4] sm:$0xf]
  %v18 = vld [vmem:[%s1 + $0x8] sm:$0xf]
  %v19 = vld [vmem:[%s1 + $0xc] sm:$0xf]
  %v24 = vunpack.c.l.b16 %v16
  %v25 = vunpack.c.l.b16 %v17
  %v26 = vunpack.c.l.b16 %v18
  %v27 = vunpack.c.l.b16 %v19
  %v28 = vpack.c.b16 %v25, %v24
  %v29 = vpack.c.b16 %v27, %v26
  %vm32 = vcmask 261120
  %v34 = vsel %vm32, %v15, 0
  %36 = vmatprep.subr.bf16.mxu0 0
  %37 = vmatpush1.bf16.msra.mxu0 %v28
  %38 = vmatprep.subr.bf16.mxu0 0
  %39 = vmatpush1.bf16.msra.mxu0 %v29
  %40 = vmatprep.subr.bf16.mxu0 0
  %41 = vmatpush1.bf16.msra.mxu0 0
  %42 = vmatprep.subr.bf16.mxu0 0
  %43 = vmatpush1.bf16.msra.mxu0 0
  %44 = vmatprep.subr.bf16.mxu0 0
  %45 = vmatpush1.bf16.msra.mxu0 0
  %46 = vmatprep.subr.bf16.mxu0 0
  %47 = vmatpush1.bf16.msra.mxu0 0
  %48 = vmatprep.subr.bf16.mxu0 0
  %49 = vmatpush1.bf16.msra.mxu0 0
  %50 = vmatprep.subr.bf16.mxu0 0
  %51 = vmatpush1.bf16.msra.mxu0 0
  %52 = vmatprep.subr.bf16.mxu0 0
  %53 = vmatpush1.bf16.msra.mxu0 0
  %54 = vmatprep.subr.bf16.mxu0 0
  %55 = vmatpush1.bf16.msra.mxu0 0
  %56 = vmatprep.subr.bf16.mxu0 0
  %57 = vmatpush1.bf16.msra.mxu0 0
  %58 = vmatprep.subr.bf16.mxu0 0
  %59 = vmatpush1.bf16.msra.mxu0 0
  %60 = vmatprep.subr.bf16.mxu0 0
  %61 = vmatpush1.bf16.msra.mxu0 0
  %62 = vmatprep.subr.bf16.mxu0 0
  %63 = vmatpush1.bf16.msra.mxu0 0
  %64 = vmatprep.subr.bf16.mxu0 0
  %65 = vmatpush1.bf16.msra.mxu0 0
  %66 = vmatprep.subr.bf16.mxu0 0
  %67 = vmatpush1.bf16.msra.mxu0 0
  %68 = vmatprep.mubr.bf16.mxu0 0
  %69 = vmatmul.mubr.bf16.gmra.mrb[0].mxu0 %v34
  %v70 = vpop.f32.mrb[0].mxu0
  %v71 = vadd.f32 0.0, %v70
  %v72 = vpop.f32.mrb[0].mxu0
  %v73 = vpop.f32.mrb[0].mxu0
  %v74 = vpop.f32.mrb[0].mxu0
  %75 = vdwg.mxu0
  %v76 = vld [vmem:[%s2] sm:$0xf]
  %v77 = vunpack.c.l.bf16 %v76
  %v78 = vmul.f32 %v71, %v77
  %v79 = vsel %vm32, %v78, 0.0
  %80 = vadd.xlane.f32.xlu0 %v79
  %v81 = vpop.xlane.xlu0 %80
  %v82 = vrot.slane %v77, 7
  %v83 = vmul.f32 %v71, %v82
  %v84 = vsel %vm32, %v83, 0.0
  %85 = vadd.xlane.f32.xlu0 %v84
  %v86 = vpop.xlane.xlu0 %85
  %v87 = vrot.slane %v77, 6
  %v88 = vmul.f32 %v71, %v87
  %v89 = vsel %vm32, %v88, 0.0
  %90 = vadd.xlane.f32.xlu0 %v89
  %v91 = vpop.xlane.xlu0 %90
  %v92 = vrot.slane %v77, 5
  %v93 = vmul.f32 %v71, %v92
  %v94 = vsel %vm32, %v93, 0.0
  %95 = vadd.xlane.f32.xlu0 %v94
  %v96 = vpop.xlane.xlu0 %95
  %vm97 = vcmask 7168
  %v98 = vsel %vm97, %v81, %v86
  %vm99 = vcmask 15360
  %v100 = vsel %vm99, %v98, %v91
  %vm101 = vcmask 23552
  %v102 = vsel %vm101, %v100, %v96
  %vm103 = vcmask 31744
  %104 = vst.msk [vmem:[%s3] sm:$0xff] %vm103, %v102
  // Predicated region
  $region14: #{con_discriminator_forward.1} parent=0 // pred_check
    _
  $region15: #{con_discriminator_forward.1} parent=0 // pred_check_branch
    %106 = sbr.rel (0) target = $region17
  $region16: #{con_discriminator_forward.1} parent=0 // pred_region
    _
  $region17: #{con_discriminator_forward.1} parent=0 // pred_fallthru
    _
  // Predicated region
  $region18: #{con_discriminator_forward.1} parent=0 // pred_check
    _
  $region19: #{con_discriminator_forward.1} parent=0 // pred_check_branch
    %108 = sbr.rel (0) target = $region21
  $region20: #{con_discriminator_forward.1} parent=0 // pred_region
    _
  $region21: #{con_discriminator_forward.1} parent=0 // pred_fallthru
    _

</llo_original>
